<compile_context>
chip_gen: v6e
topology: v6e:2x2x1
jax: 0.10.0
libtpu: 0.0.40
codegen_flags: <defaults>
</compile_context>

<pallas_src>
import functools

import jax
import jax.numpy as jnp
from jax import lax
from jax.experimental import pallas as pl
from jax.experimental.pallas import tpu as pltpu


def _round_up(x, m):
    return (x + m - 1) // m * m


def _pick_tile_m(m):
    """Rows of the im2col matrix per grid step.

    >=256 rows fills a full 256-wide MXU pass on v6e/v7x (v5e's 128-wide MXU is
    already full at 128).  Prefer >=2 grid steps so the "parallel" grid axis can
    shard across TensorCores (v7x megacore); otherwise take the largest tile
    that fits so tiny problems run in as few pipeline steps as possible.
    """
    for tm in (512, 256):
        if m >= 2 * tm:
            return tm
    for tm in (1024, 512, 256, 128, 64, 32, 16, 8):
        if m >= tm:
            return tm
    return 8


def _cbr_matmul_kernel(p_ref, w_ref, shift_ref, o_ref):
    """Fused conv-as-matmul + folded-BN shift + LeakyReLU(0.1).

    p_ref:     (tm, Kp)      im2col patches (bf16, K zero-padded to Kp)
    w_ref:     (Kp, Coutp)   BN-scale-folded conv weights (bf16, Cout padded to 128)
    shift_ref: (1, Coutp)    beta - running_mean * scale (f32)
    o_ref:     (tm, Cout)    bf16 output tile -- only the real channels are stored
    """
    acc = jnp.dot(p_ref[...], w_ref[...], preferred_element_type=jnp.float32)
    y = acc + shift_ref[...]
    y = jnp.maximum(y, 0.1 * y)          # LeakyReLU(0.1): single vmax
    o_ref[...] = y[:, :o_ref.shape[-1]].astype(o_ref.dtype)


@functools.partial(jax.jit, static_argnames=("kernel_size", "stride"))
def darknet_cbr(x_nchw, w_oihw, gamma, beta, running_mean, running_var,
                kernel_size=3, stride=1):
    """NCHW in / NCHW out, matching PyTorch DarknetCBR (eval mode)."""
    if stride != 1:
        raise NotImplementedError("DarknetConv2d stride=2 path not implemented")
    if kernel_size % 2 != 1:
        raise ValueError("only odd kernel_size supported for 'same' padding")

    eps = 1e-3
    n, cin, h, w = x_nchw.shape
    cout = w_oihw.shape[0]
    k = kernel_size
    pad = k // 2
    kkc = k * k * cin

    # ---- wrapper-side im2col (lane-dense K); kernel is pure matmul + epilogue.
    x_nhwc = jnp.transpose(x_nchw, (0, 2, 3, 1))
    x_pad = jnp.pad(x_nhwc, ((0, 0), (pad, pad), (pad, pad), (0, 0)))
    taps = [x_pad[:, dh:dh + h, dw:dw + w, :]
            for dh in range(k) for dw in range(k)]
    patches = jnp.concatenate(taps, axis=-1).reshape(n * h * w, kkc)

    m = n * h * w
    tm = _pick_tile_m(m)
    mp = _round_up(m, tm)
    kp = _round_up(kkc, 64)                  # bf16-tile-friendly contraction dim
    coutp = _round_up(max(cout, 128), 128)   # 128-lane pad for the MXU operand ONLY

    patches = jnp.pad(patches, ((0, mp - m), (0, kp - kkc))).astype(jnp.bfloat16)

    # ---- fold eval-mode BN scale into the weights; keep only the shift.
    inv = gamma / jnp.sqrt(running_var + eps)                 # (Cout,)
    w_hwio = jnp.transpose(w_oihw, (2, 3, 1, 0))              # (k, k, Cin, Cout)
    w_mat = (w_hwio * inv).reshape(kkc, cout)
    w_mat = jnp.pad(w_mat, ((0, kp - kkc), (0, coutp - cout))).astype(jnp.bfloat16)
    shift = jnp.pad(beta - running_mean * inv, (0, coutp - cout))
    shift = shift.reshape(1, coutp).astype(jnp.float32)

    grid = (mp // tm,)
    flops = 2 * m * kkc * cout
    bytes_accessed = (mp * kp + kp * coutp + mp * cout) * 2 + coutp * 4

    out = pl.pallas_call(
        _cbr_matmul_kernel,
        out_shape=jax.ShapeDtypeStruct((mp, cout), jnp.bfloat16),
        grid=grid,
        in_specs=[
            pl.BlockSpec((tm, kp), lambda i: (i, 0)),
            # Constant blocks (weights / BN shift) across the whole grid.
            pl.BlockSpec((kp, coutp), lambda i: (0, 0)),
            pl.BlockSpec((1, coutp), lambda i: (0, 0)),
        ],
        out_specs=pl.BlockSpec((tm, cout), lambda i: (i, 0)),
        compiler_params=pltpu.CompilerParams(
            dimension_semantics=("parallel",),
            vmem_limit_bytes=32 * 1024 * 1024),
        cost_estimate=pl.CostEstimate(
            flops=flops, transcendentals=0, bytes_accessed=bytes_accessed),
    )(patches, w_mat, shift)

    out_nhwc = out[:m].reshape(n, h, w, cout)
    return jnp.transpose(out_nhwc, (0, 3, 1, 2)).astype(x_nchw.dtype)


def _reference(x_nchw, w_oihw, gamma, beta, running_mean, running_var):
    """Pure-JAX f32 reference (lax.conv) for the correctness check."""
    eps = 1e-3
    y = lax.conv_general_dilated(
        x_nchw, w_oihw, window_strides=(1, 1), padding="SAME",
        dimension_numbers=("NCHW", "OIHW", "NCHW"))
    inv = gamma / jnp.sqrt(running_var + eps)
    y = y * inv[None, :, None, None] + (beta - running_mean * inv)[None, :, None, None]
    return jnp.where(y > 0, y, 0.1 * y)


if __name__ == "__main__":
    # Module config: DarknetCBR(in_channels=4, out_channels=8, kernel_size=3)
    N, Cin, H, W, Cout, K = 2, 4, 16, 16, 8, 3

    key = jax.random.PRNGKey(0)
    kx, kw = jax.random.split(key)
    x = jax.random.normal(kx, (N, Cin, H, W), dtype=jnp.float32)
    wgt = 0.1 * jax.random.normal(kw, (Cout, Cin, K, K), dtype=jnp.float32)

    # Deterministic, non-trivial BN parameters (eval-mode running stats).
    gamma = 1.0 + 0.05 * jnp.arange(Cout, dtype=jnp.float32)
    beta = 0.01 * jnp.arange(Cout, dtype=jnp.float32)
    running_mean = 0.02 * jnp.arange(Cout, dtype=jnp.float32)
    running_var = 1.0 + 0.03 * jnp.arange(Cout, dtype=jnp.float32)

    out = darknet_cbr(x, wgt, gamma, beta, running_mean, running_var, kernel_size=K)
    out = jax.block_until_ready(out)

    ref = _reference(x, wgt, gamma, beta, running_mean, running_var)
    assert out.shape == (N, Cout, H, W)
    err = float(jnp.max(jnp.abs(out - ref)))
    # bf16 matmul inputs + bf16 output with f32 accumulation -> loose tolerance.
    assert err < 5e-2, f"mismatch vs JAX reference: {err}"

    print("KERNEL_OK")
</pallas_src>

<mosaic_0001>
module attributes {stable_mosaic.version = 11 : i64} {
  func.func @_cbr_matmul_kernel(%arg0: i32, %arg1: memref<256x64xbf16, #tpu.memory_space<vmem>>, %arg2: memref<64x128xbf16, #tpu.memory_space<vmem>>, %arg3: memref<1x128xf32, #tpu.memory_space<vmem>>, %arg4: memref<256x8xbf16, #tpu.memory_space<vmem>>) attributes {dimension_semantics = [#tpu.dimension_semantics<parallel>], iteration_bounds = array<i64: 2>, scalar_prefetch = 0 : i64, scratch_operands = 0 : i64, tpu.core_type = #tpu.core_type<tc>, window_params = [{transform_indices = @transform_0, window_bounds = array<i64: 256, 64>}, {pipeline_mode = #tpu.pipeline_mode<synchronous>, transform_indices = @transform_1, window_bounds = array<i64: 64, 128>}, {pipeline_mode = #tpu.pipeline_mode<synchronous>, transform_indices = @transform_2, window_bounds = array<i64: 1, 128>}, {transform_indices = @transform_3, window_bounds = array<i64: 256, 8>}]} {
    %c0 = arith.constant 0 : index
    %c0_0 = arith.constant 0 : index
    %0 = vector.load %arg1[%c0, %c0_0] : memref<256x64xbf16, #tpu.memory_space<vmem>>, vector<256x64xbf16>
    %c0_1 = arith.constant 0 : index
    %c0_2 = arith.constant 0 : index
    %1 = vector.load %arg2[%c0_1, %c0_2] : memref<64x128xbf16, #tpu.memory_space<vmem>>, vector<64x128xbf16>
    %cst = arith.constant dense<0.000000e+00> : vector<256x128xf32>
    %2 = tpu.matmul %0, %1, %cst {dimension_numbers = #tpu.dot_dimension_numbers<[1], [0], [0], [1], [0, 0, 1, 1], [], []>} : vector<256x64xbf16>, vector<64x128xbf16>, vector<256x128xf32> -> vector<256x128xf32>
    %c0_3 = arith.constant 0 : index
    %c0_4 = arith.constant 0 : index
    %3 = vector.load %arg3[%c0_3, %c0_4] : memref<1x128xf32, #tpu.memory_space<vmem>>, vector<1x128xf32>
    %4 = vector.broadcast %3 : vector<1x128xf32> to vector<256x128xf32>
    %5 = arith.addf %2, %4 : vector<256x128xf32>
    %cst_5 = arith.constant 1.000000e-01 : f32
    %6 = vector.broadcast %cst_5 : f32 to vector<256x128xf32>
    %7 = arith.mulf %6, %5 : vector<256x128xf32>
    %8 = arith.maximumf %5, %7 : vector<256x128xf32>
    %9 = vector.extract_strided_slice %8 {offsets = [0, 0], sizes = [256, 8], strides = [1, 1]} : vector<256x128xf32> to vector<256x8xf32>
    %10 = arith.truncf %9 : vector<256x8xf32> to vector<256x8xbf16>
    %c0_6 = arith.constant 0 : index
    %c0_7 = arith.constant 0 : index
    %11 = vector.load %arg4[%c0_6, %c0_7] : memref<256x8xbf16, #tpu.memory_space<vmem>>, vector<256x8xbf16>
    tpu.vector_store %arg4[%c0_6, %c0_7], %10 {strides = array<i32>} : memref<256x8xbf16, #tpu.memory_space<vmem>>, vector<256x8xbf16>,
    return
  }
  func.func @transform_0(%arg0: i32) -> (i32, i32) {
    %c0_i32 = arith.constant 0 : i32
    %c0_i32_0 = arith.constant 0 : i32
    return %arg0, %c0_i32 : i32, i32
  }
  func.func @transform_1(%arg0: i32) -> (i32, i32) {
    %c0_i32 = arith.constant 0 : i32
    %c0_i32_0 = arith.constant 0 : i32
    %c0_i32_1 = arith.constant 0 : i32
    return %c0_i32, %c0_i32_0 : i32, i32
  }
  func.func @transform_2(%arg0: i32) -> (i32, i32) {
    %c0_i32 = arith.constant 0 : i32
    %c0_i32_0 = arith.constant 0 : i32
    %c0_i32_1 = arith.constant 0 : i32
    return %c0_i32, %c0_i32_0 : i32, i32
  }
  func.func @transform_3(%arg0: i32) -> (i32, i32) {
    %c0_i32 = arith.constant 0 : i32
    %c0_i32_0 = arith.constant 0 : i32
    return %arg0, %c0_i32 : i32, i32
  }
}

</mosaic_0001>

<llo_original>
// kernel: darknet_cbr.1
$region0: #{darknet_cbr.1}
  #allocation0 [shape = 'u32[]', space=smem, size = 0x4, offset = 0x4, fixed_abs, tag = 'smem constant byte address 0x4 - core index']
  #allocation1 [shape = 'u32[144,128]{1,0:T(1,128)}', space=vmem, size = 0x12000, scoped, tag = 'internal scratch']
  %s0 = inlined_call_operand.vmem [shape: bf16[512,64], index: 0, kind: input, shape index: {}]
  %s1 = inlined_call_operand.vmem [shape: bf16[64,128], index: 1, kind: input, shape index: {}]
  %s2 = inlined_call_operand.vmem [shape: f32[1,128], index: 2, kind: input, shape index: {}]
  %s3 = inlined_call_operand.vmem [shape: bf16[512,8], index: 3, kind: output, shape index: {}]
  %s4 = sld [smem:[#allocation0]]
  $region45: #{darknet_cbr.1} parent=0
    _
  %s6 = ssub.s32 1, %s4
  %s7 = scalar_select 0, %s6, %s4
  loop: start=0, step=1, limit=4
  $region2: #{darknet_cbr.1} parent=0 // loop_pre_header
    _
  $region3: #{darknet_cbr.1} parent=0 // loop_header
    %s9 = sphi 0, %s13
    %p10 = scmp.ge.s32.totalorder %s9, 4
    %s19 = sphi 0, %s21
    %s22 = sphi 0, %s19
    %s23 = sphi 0, %s22
    %s39 = sphi 0, %s23
    %s43 = sphi 0, %s43
    %s45 = sphi 0, %s43
    %s46 = sphi 0, %s45
    %s60 = sphi 0, %s46
    %s64 = sphi 0, %s64
    %s66 = sphi 0, %s64
    %s67 = sphi 0, %s66
    %s81 = sphi 0, %s67
    %s87 = sphi 0, %s89
    %s90 = sphi 0, %s87
    %s91 = sphi 0, %s90
    %s107 = sphi 0, %s91
  $region4: #{darknet_cbr.1} parent=0 // loop_header_branch
    %12 = sbr.rel (%p10) target = $region8
  $region5: #{darknet_cbr.1} parent=0 // loop_body
    %s14 = ssub.s32 %s9, 1
    %s15 = ssub.s32 %s9, 2
    %s16 = sadd.s32 %s9, 1
    %s17 = ssub.s32 %s9, %s16
    %p18 = scmp.eq.s32.totalorder %s17, 0
    %s20 = sadd.s32 %s19, 1
    %s21 = scalar_select %p18, %s19, %s20
    %p24 = pneg %p18
    %p25 = scmp.eq.s32.totalorder %s9, 1
    %p26 = por %p24, %p25
    %p27 = scmp.ne.s32.totalorder %s19, %s22
    %p28 = scmp.eq.s32.totalorder %s9, 0
    %p29 = por %p27, %p28
    %p30 = scmp.ne.s32.totalorder %s19, %s22
    %p31 = scmp.eq.s32.totalorder %s14, 1
    %p32 = por %p30, %p31
    %p33 = scmp.ne.s32.totalorder %s22, %s23
    %p34 = scmp.eq.s32.totalorder %s14, 0
    %p35 = por %p33, %p34
    %p36 = scmp.ne.s32.totalorder %s22, %s23
    %p37 = scmp.eq.s32.totalorder %s15, 1
    %p38 = por %p36, %p37
    %p40 = scmp.ne.s32.totalorder %s23, %s39
    %p41 = scmp.eq.s32.totalorder %s15, 0
    %p42 = por %p40, %p41
    %s44 = sadd.s32 %s43, 1
    %p47 = scmp.eq.s32.totalorder %s9, 1
    %p48 = scmp.ne.s32.totalorder %s43, %s45
    %p49 = scmp.eq.s32.totalorder %s9, 0
    %p50 = por %p48, %p49
    %p51 = scmp.ne.s32.totalorder %s43, %s45
    %p52 = scmp.eq.s32.totalorder %s14, 1
    %p53 = por %p51, %p52
    %p54 = scmp.ne.s32.totalorder %s45, %s46
    %p55 = scmp.eq.s32.totalorder %s14, 0
    %p56 = por %p54, %p55
    %p57 = scmp.ne.s32.totalorder %s45, %s46
    %p58 = scmp.eq.s32.totalorder %s15, 1
    %p59 = por %p57, %p58
    %p61 = scmp.ne.s32.totalorder %s46, %s60
    %p62 = scmp.eq.s32.totalorder %s15, 0
    %p63 = por %p61, %p62
    %s65 = sadd.s32 %s64, 1
    %p68 = scmp.eq.s32.totalorder %s9, 1
    %p69 = scmp.ne.s32.totalorder %s64, %s66
    %p70 = scmp.eq.s32.totalorder %s9, 0
    %p71 = por %p69, %p70
    %p72 = scmp.ne.s32.totalorder %s64, %s66
    %p73 = scmp.eq.s32.totalorder %s14, 1
    %p74 = por %p72, %p73
    %p75 = scmp.ne.s32.totalorder %s66, %s67
    %p76 = scmp.eq.s32.totalorder %s14, 0
    %p77 = por %p75, %p76
    %p78 = scmp.ne.s32.totalorder %s66, %s67
    %p79 = scmp.eq.s32.totalorder %s15, 1
    %p80 = por %p78, %p79
    %p82 = scmp.ne.s32.totalorder %s67, %s81
    %p83 = scmp.eq.s32.totalorder %s15, 0
    %p84 = por %p82, %p83
    %s85 = ssub.s32 %s9, %s16
    %p86 = scmp.eq.s32.totalorder %s85, 0
    %s88 = sadd.s32 %s87, 1
    %s89 = scalar_select %p86, %s87, %s88
    %p92 = pneg %p86
    %p93 = scmp.eq.s32.totalorder %s9, 1
    %p94 = por %p92, %p93
    %p95 = scmp.ne.s32.totalorder %s87, %s90
    %p96 = scmp.eq.s32.totalorder %s9, 0
    %p97 = por %p95, %p96
    %p98 = scmp.ne.s32.totalorder %s87, %s90
    %p99 = scmp.eq.s32.totalorder %s14, 1
    %p100 = por %p98, %p99
    %p101 = scmp.ne.s32.totalorder %s90, %s91
    %p102 = scmp.eq.s32.totalorder %s14, 0
    %p103 = por %p101, %p102
    %p104 = scmp.ne.s32.totalorder %s90, %s91
    %p105 = scmp.eq.s32.totalorder %s15, 1
    %p106 = por %p104, %p105
    %p108 = scmp.ne.s32.totalorder %s91, %s107
    %p109 = scmp.eq.s32.totalorder %s15, 0
    %p110 = por %p108, %p109
    %p111 = scmp.le.s32.totalorder 1, %s9
    %p112 = scmp.lt.s32.totalorder %s9, 3
    %p113 = pnand %p111, %p112
    %p114 = pneg %p113
    // Predicated region
    $region9: #{darknet_cbr.1} parent=5 // pred_check
      _
    $region10: #{darknet_cbr.1} parent=5 // pred_check_branch
      %116 = sbr.rel (%p113) target = $region12
    $region11: #{darknet_cbr.1} parent=5 // pred_region
      %s117 = ssub.s32 %s9, 1
      // Predicated region
      $region13: #{darknet_cbr.1} parent=11 // pred_check
        %p118 = pneg %p56
      $region14: #{darknet_cbr.1} parent=11 // pred_check_branch
        %120 = sbr.rel (%p118) target = $region16
      $region15: #{darknet_cbr.1} parent=11 // pred_region
        _
      $region16: #{darknet_cbr.1} parent=11 // pred_fallthru
        _
      // Predicated region
      $region17: #{darknet_cbr.1} parent=11 // pred_check
        %p121 = pneg %p77
      $region18: #{darknet_cbr.1} parent=11 // pred_check_branch
        %123 = sbr.rel (%p121) target = $region20
      $region19: #{darknet_cbr.1} parent=11 // pred_region
        _
      $region20: #{darknet_cbr.1} parent=11 // pred_fallthru
        _
    $region12: #{darknet_cbr.1} parent=5 // pred_fallthru
      _
    %p124 = scmp.lt.s32.totalorder %s9, 2
    // Predicated region
    $region21: #{darknet_cbr.1} parent=5 // pred_check
      %p125 = pneg %p124
    $region22: #{darknet_cbr.1} parent=5 // pred_check_branch
      %127 = sbr.rel (%p125) target = $region24
    $region23: #{darknet_cbr.1} parent=5 // pred_region
      // Predicated region
      $region25: #{darknet_cbr.1} parent=23 // pred_check
        %p128 = pneg %p29
      $region26: #{darknet_cbr.1} parent=23 // pred_check_branch
        %130 = sbr.rel (%p128) target = $region28
      $region27: #{darknet_cbr.1} parent=23 // pred_region
        %s131 = smul.u32 32, %s9
        %p132 = scmp.lt.s32.totalorder %s131, 63
        %s133 = scalar_select %p132, %s131, 63
        %s134 = smul.addr %s133, 4
        %s135 = scalar_lea.vmem %s0, %s134
        %s136 = smul.u32 32, %s9
      $region28: #{darknet_cbr.1} parent=23 // pred_fallthru
        _
    $region24: #{darknet_cbr.1} parent=5 // pred_fallthru
      _
    %p137 = scmp.le.s32.totalorder 1, %s9
    %p138 = scmp.lt.s32.totalorder %s9, 3
    %p139 = pnand %p137, %p138
    %p140 = pneg %p139
    // Predicated region
    $region29: #{darknet_cbr.1} parent=5 // pred_check
      _
    $region30: #{darknet_cbr.1} parent=5 // pred_check_branch
      %142 = sbr.rel (%p139) target = $region32
    $region31: #{darknet_cbr.1} parent=5 // pred_region
      %s143 = ssub.s32 %s9, 1
      %s144 = smul.u32 32, %s14
      %p145 = scmp.lt.s32.totalorder %s144, 63
      %s146 = scalar_select %p145, %s144, 63
      %s147 = smul.addr %s146, 4
      %s148 = scalar_lea.vmem %s0, %s147
      %p149 = pneg %p35
      %p150 = pneg %p32
      %p151 = pneg %p56
      %p152 = pneg %p53
      %p153 = pneg %p77
      %p154 = pneg %p74
      %p155 = pneg %p103
      %p156 = pneg %p100
      %s157 = smul.u32 32, %s14
      %p158 = scmp.lt.s32.totalorder %s157, 63
      %s159 = scalar_select %p158, %s157, 63
      %s160 = smul.addr %s159, 4
      %s161 = scalar_lea.vmem %s3, %s160
      %s162 = smul.u32 32, %s14
      %p163 = scmp.lt.s32.totalorder %s162, 63
      %s164 = scalar_select %p163, %s162, 63
      %s165 = smul.addr %s164, 4
      %s166 = scalar_lea.vmem %s0, %s165
      %s167 = smul.u32 32, %s14
      %s168 = smul.u32 32, %s14
      %p169 = scmp.lt.s32.totalorder %s168, 63
      %s170 = scalar_select %p169, %s168, 63
      %s171 = smul.addr %s170, 4
      %s172 = scalar_lea.vmem %s3, %s171
      %s173 = smul.u32 32, %s14
      %v175 = vld [vmem:[%s166] sm:$0xf]
      %v176 = vld [vmem:[%s166 + $0x4] sm:$0xf]
      %v177 = vld [vmem:[%s166 + $0x8] sm:$0xf]
      %v178 = vld [vmem:[%s166 + $0xc] sm:$0xf]
      %v179 = vld [vmem:[%s166 + $0x10] sm:$0xf]
      %v180 = vld [vmem:[%s166 + $0x14] sm:$0xf]
      %v181 = vld [vmem:[%s166 + $0x18] sm:$0xf]
      %v182 = vld [vmem:[%s166 + $0x1c] sm:$0xf]
      %v183 = vld [vmem:[%s166 + $0x20] sm:$0xf]
      %v184 = vld [vmem:[%s166 + $0x24] sm:$0xf]
      %v185 = vld [vmem:[%s166 + $0x28] sm:$0xf]
      %v186 = vld [vmem:[%s166 + $0x2c] sm:$0xf]
      %v187 = vld [vmem:[%s166 + $0x30] sm:$0xf]
      %v188 = vld [vmem:[%s166 + $0x34] sm:$0xf]
      %v189 = vld [vmem:[%s166 + $0x38] sm:$0xf]
      %v190 = vld [vmem:[%s166 + $0x3c] sm:$0xf]
      %v191 = vld [vmem:[%s166 + $0x40] sm:$0xf]
      %v192 = vld [vmem:[%s166 + $0x44] sm:$0xf]
      %v193 = vld [vmem:[%s166 + $0x48] sm:$0xf]
      %v194 = vld [vmem:[%s166 + $0x4c] sm:$0xf]
      %v195 = vld [vmem:[%s166 + $0x50] sm:$0xf]
      %v196 = vld [vmem:[%s166 + $0x54] sm:$0xf]
      %v197 = vld [vmem:[%s166 + $0x58] sm:$0xf]
      %v198 = vld [vmem:[%s166 + $0x5c] sm:$0xf]
      %v199 = vld [vmem:[%s166 + $0x60] sm:$0xf]
      %v200 = vld [vmem:[%s166 + $0x64] sm:$0xf]
      %v201 = vld [vmem:[%s166 + $0x68] sm:$0xf]
      %v202 = vld [vmem:[%s166 + $0x6c] sm:$0xf]
      %v203 = vld [vmem:[%s166 + $0x70] sm:$0xf]
      %v204 = vld [vmem:[%s166 + $0x74] sm:$0xf]
      %v205 = vld [vmem:[%s166 + $0x78] sm:$0xf]
      %v206 = vld [vmem:[%s166 + $0x7c] sm:$0xf]
      %v207 = vld [vmem:[%s1] sm:$0xf]
      %v208 = vld [vmem:[%s1 + $0x4] sm:$0xf]
      %v209 = vld [vmem:[%s1 + $0x8] sm:$0xf]
      %v210 = vld [vmem:[%s1 + $0xc] sm:$0xf]
      %v211 = vld [vmem:[%s1 + $0x10] sm:$0xf]
      %v212 = vld [vmem:[%s1 + $0x14] sm:$0xf]
      %v213 = vld [vmem:[%s1 + $0x18] sm:$0xf]
      %v214 = vld [vmem:[%s1 + $0x1c] sm:$0xf]
      %v215 = vld [vmem:[%s2] sm:$0x1]
      %v217 = vlaneseq
      %v218 = vshrl.u32 %v217, 7
      %v219 = vsub.s32 0, %v218
      %v220 = vrot.slane %v215, %v219
      %v254 = vunpack.c.l.b16 %v175
      %v255 = vunpack.c.l.b16 %v176
      %v256 = vunpack.c.l.b16 %v177
      %v257 = vunpack.c.l.b16 %v178
      %v258 = vunpack.c.l.b16 %v179
      %v259 = vunpack.c.l.b16 %v180
      %v260 = vunpack.c.l.b16 %v181
      %v261 = vunpack.c.l.b16 %v182
      %v262 = vunpack.c.l.b16 %v183
      %v263 = vunpack.c.l.b16 %v184
      %v264 = vunpack.c.l.b16 %v185
      %v265 = vunpack.c.l.b16 %v186
      %v266 = vunpack.c.l.b16 %v187
      %v267 = vunpack.c.l.b16 %v188
      %v268 = vunpack.c.l.b16 %v189
      %v269 = vunpack.c.l.b16 %v190
      %v270 = vunpack.c.l.b16 %v191
      %v271 = vunpack.c.l.b16 %v192
      %v272 = vunpack.c.l.b16 %v193
      %v273 = vunpack.c.l.b16 %v194
      %v274 = vunpack.c.l.b16 %v195
      %v275 = vunpack.c.l.b16 %v196
      %v276 = vunpack.c.l.b16 %v197
      %v277 = vunpack.c.l.b16 %v198
      %v278 = vunpack.c.l.b16 %v199
      %v279 = vunpack.c.l.b16 %v200
      %v280 = vunpack.c.l.b16 %v201
      %v281 = vunpack.c.l.b16 %v202
      %v282 = vunpack.c.l.b16 %v203
      %v283 = vunpack.c.l.b16 %v204
      %v284 = vunpack.c.l.b16 %v205
      %v285 = vunpack.c.l.b16 %v206
      %v286 = vpack.c.b16 %v255, %v254
      %v287 = vpack.c.b16 %v257, %v256
      %v288 = vpack.c.b16 %v259, %v258
      %v289 = vpack.c.b16 %v261, %v260
      %v290 = vpack.c.b16 %v263, %v262
      %v291 = vpack.c.b16 %v265, %v264
      %v292 = vpack.c.b16 %v267, %v266
      %v293 = vpack.c.b16 %v269, %v268
      %v294 = vpack.c.b16 %v271, %v270
      %v295 = vpack.c.b16 %v273, %v272
      %v296 = vpack.c.b16 %v275, %v274
      %v297 = vpack.c.b16 %v277, %v276
      %v298 = vpack.c.b16 %v279, %v278
      %v299 = vpack.c.b16 %v281, %v280
      %v300 = vpack.c.b16 %v283, %v282
      %v301 = vpack.c.b16 %v285, %v284
      %v310 = vunpack.c.l.b16 %v207
      %v311 = vunpack.c.l.b16 %v208
      %v312 = vunpack.c.l.b16 %v209
      %v313 = vunpack.c.l.b16 %v210
      %v314 = vunpack.c.l.b16 %v211
      %v315 = vunpack.c.l.b16 %v212
      %v316 = vunpack.c.l.b16 %v213
      %v317 = vunpack.c.l.b16 %v214
      %v318 = vpack.c.b16 %v311, %v310
      %v319 = vpack.c.b16 %v313, %v312
      %v320 = vpack.c.b16 %v315, %v314
      %v321 = vpack.c.b16 %v317, %v316
      %vm326 = vcmask 523264
      %v328 = vsel %vm326, %v286, 0
      %v331 = vsel %vm326, %v287, 0
      %v334 = vsel %vm326, %v288, 0
      %v337 = vsel %vm326, %v289, 0
      %v340 = vsel %vm326, %v290, 0
      %v343 = vsel %vm326, %v291, 0
      %v346 = vsel %vm326, %v292, 0
      %v349 = vsel %vm326, %v293, 0
      %v352 = vsel %vm326, %v294, 0
      %v355 = vsel %vm326, %v295, 0
      %v358 = vsel %vm326, %v296, 0
      %v361 = vsel %vm326, %v297, 0
      %v364 = vsel %vm326, %v298, 0
      %v367 = vsel %vm326, %v299, 0
      %v370 = vsel %vm326, %v300, 0
      %v373 = vsel %vm326, %v301, 0
      %375 = vmatprep.subr.bf16.mxu0 0
      %376 = vmatpush1.bf16.msra.mxu0 0
      %377 = vmatprep.subr.bf16.mxu0 0
      %378 = vmatpush1.bf16.msra.mxu0 0
      %379 = vmatprep.subr.bf16.mxu0 0
      %380 = vmatpush1.bf16.msra.mxu0 0
      %381 = vmatprep.subr.bf16.mxu0 0
      %382 = vmatpush1.bf16.msra.mxu0 0
      %383 = vmatprep.subr.bf16.mxu0 0
      %384 = vmatpush1.bf16.msra.mxu0 %v321
      %385 = vmatprep.subr.bf16.mxu0 0
      %386 = vmatpush1.bf16.msra.mxu0 %v320
      %387 = vmatprep.subr.bf16.mxu0 0
      %388 = vmatpush1.bf16.msra.mxu0 %v319
      %389 = vmatprep.subr.bf16.mxu0 0
      %390 = vmatpush1.bf16.msra.mxu0 %v318
      %391 = vmatprep.subr.bf16.mxu0 0
      %392 = vmatpush2.bf16.msra.mxu0 0
      %393 = vmatprep.subr.bf16.mxu0 0
      %394 = vmatpush2.bf16.msra.mxu0 0
      %395 = vmatprep.subr.bf16.mxu0 0
      %396 = vmatpush2.bf16.msra.mxu0 0
      %397 = vmatprep.subr.bf16.mxu0 0
      %398 = vmatpush2.bf16.msra.mxu0 0
      %399 = vmatprep.subr.bf16.mxu0 0
      %400 = vmatpush2.bf16.msra.mxu0 0
      %401 = vmatprep.subr.bf16.mxu0 0
      %402 = vmatpush2.bf16.msra.mxu0 0
      %403 = vmatprep.subr.bf16.mxu0 0
      %404 = vmatpush2.bf16.msra.mxu0 0
      %405 = vmatprep.subr.bf16.mxu0 0
      %406 = vmatpush2.bf16.msra.mxu0 0
      %407 = vmatprep.mubr.bf16.mxu0 0
      %408 = vmatmul.mubr.bf16.gmra.mxu0 %v328
      %v409 = vpop.f32.mrf.mxu0
      %v410 = vadd.f32 %v220, %v409
      %v411 = vpop.f32.mrf.mxu0
      %v412 = vpop.f32.mrf.mxu0
      %v413 = vadd.f32 %v220, %v412
      %v414 = vpop.f32.mrf.mxu0
      %415 = vmatprep.mubr.bf16.mxu0 0
      %416 = vmatmul.mubr.bf16.gmra.mxu0 %v331
      %v417 = vpop.f32.mrf.mxu0
      %v418 = vadd.f32 %v220, %v417
      %v419 = vpop.f32.mrf.mxu0
      %v420 = vpop.f32.mrf.mxu0
      %v421 = vadd.f32 %v220, %v420
      %v422 = vpop.f32.mrf.mxu0
      %423 = vmatprep.mubr.bf16.mxu0 0
      %424 = vmatmul.mubr.bf16.gmra.mxu0 %v334
      %v425 = vpop.f32.mrf.mxu0
      %v426 = vadd.f32 %v220, %v425
      %v427 = vpop.f32.mrf.mxu0
      %v428 = vpop.f32.mrf.mxu0
      %v429 = vadd.f32 %v220, %v428
      %v430 = vpop.f32.mrf.mxu0
      %431 = vmatprep.mubr.bf16.mxu0 0
      %432 = vmatmul.mubr.bf16.gmra.mxu0 %v337
      %v433 = vpop.f32.mrf.mxu0
      %v434 = vadd.f32 %v220, %v433
      %v435 = vpop.f32.mrf.mxu0
      %v436 = vpop.f32.mrf.mxu0
      %v437 = vadd.f32 %v220, %v436
      %v438 = vpop.f32.mrf.mxu0
      %439 = vmatprep.mubr.bf16.mxu0 0
      %440 = vmatmul.mubr.bf16.gmra.mxu0 %v340
      %v441 = vpop.f32.mrf.mxu0
      %v442 = vadd.f32 %v220, %v441
      %v443 = vpop.f32.mrf.mxu0
      %v444 = vpop.f32.mrf.mxu0
      %v445 = vadd.f32 %v220, %v444
      %v446 = vpop.f32.mrf.mxu0
      %447 = vmatprep.mubr.bf16.mxu0 0
      %448 = vmatmul.mubr.bf16.gmra.mxu0 %v343
      %v449 = vpop.f32.mrf.mxu0
      %v450 = vadd.f32 %v220, %v449
      %v451 = vpop.f32.mrf.mxu0
      %v452 = vpop.f32.mrf.mxu0
      %v453 = vadd.f32 %v220, %v452
      %v454 = vpop.f32.mrf.mxu0
      %455 = vmatprep.mubr.bf16.mxu0 0
      %456 = vmatmul.mubr.bf16.gmra.mxu0 %v346
      %v457 = vpop.f32.mrf.mxu0
      %v458 = vadd.f32 %v220, %v457
      %v459 = vpop.f32.mrf.mxu0
      %v460 = vpop.f32.mrf.mxu0
      %v461 = vadd.f32 %v220, %v460
      %v462 = vpop.f32.mrf.mxu0
      %463 = vmatprep.mubr.bf16.mxu0 0
      %464 = vmatmul.mubr.bf16.gmra.mxu0 %v349
      %v465 = vpop.f32.mrf.mxu0
      %v466 = vadd.f32 %v220, %v465
      %v467 = vpop.f32.mrf.mxu0
      %v468 = vpop.f32.mrf.mxu0
      %v469 = vadd.f32 %v220, %v468
      %v470 = vpop.f32.mrf.mxu0
      %471 = vmatprep.mubr.bf16.mxu0 0
      %472 = vmatmul.mubr.bf16.gmra.mxu0 %v352
      %v473 = vpop.f32.mrf.mxu0
      %v474 = vadd.f32 %v220, %v473
      %v475 = vpop.f32.mrf.mxu0
      %v476 = vpop.f32.mrf.mxu0
      %v477 = vadd.f32 %v220, %v476
      %v478 = vpop.f32.mrf.mxu0
      %479 = vmatprep.mubr.bf16.mxu0 0
      %480 = vmatmul.mubr.bf16.gmra.mxu0 %v355
      %v481 = vpop.f32.mrf.mxu0
      %v482 = vadd.f32 %v220, %v481
      %v483 = vpop.f32.mrf.mxu0
      %v484 = vpop.f32.mrf.mxu0
      %v485 = vadd.f32 %v220, %v484
      %v486 = vpop.f32.mrf.mxu0
      %487 = vmatprep.mubr.bf16.mxu0 0
      %488 = vmatmul.mubr.bf16.gmra.mxu0 %v358
      %v489 = vpop.f32.mrf.mxu0
      %v490 = vadd.f32 %v220, %v489
      %v491 = vpop.f32.mrf.mxu0
      %v492 = vpop.f32.mrf.mxu0
      %v493 = vadd.f32 %v220, %v492
      %v494 = vpop.f32.mrf.mxu0
      %495 = vmatprep.mubr.bf16.mxu0 0
      %496 = vmatmul.mubr.bf16.gmra.mxu0 %v361
      %v497 = vpop.f32.mrf.mxu0
      %v498 = vadd.f32 %v220, %v497
      %v499 = vpop.f32.mrf.mxu0
      %v500 = vpop.f32.mrf.mxu0
      %v501 = vadd.f32 %v220, %v500
      %v502 = vpop.f32.mrf.mxu0
      %503 = vmatprep.mubr.bf16.mxu0 0
      %504 = vmatmul.mubr.bf16.gmra.mxu0 %v364
      %v505 = vpop.f32.mrf.mxu0
      %v506 = vadd.f32 %v220, %v505
      %v507 = vpop.f32.mrf.mxu0
      %v508 = vpop.f32.mrf.mxu0
      %v509 = vadd.f32 %v220, %v508
      %v510 = vpop.f32.mrf.mxu0
      %511 = vmatprep.mubr.bf16.mxu0 0
      %512 = vmatmul.mubr.bf16.gmra.mxu0 %v367
      %v513 = vpop.f32.mrf.mxu0
      %v514 = vadd.f32 %v220, %v513
      %v515 = vpop.f32.mrf.mxu0
      %v516 = vpop.f32.mrf.mxu0
      %v517 = vadd.f32 %v220, %v516
      %v518 = vpop.f32.mrf.mxu0
      %519 = vmatprep.mubr.bf16.mxu0 0
      %520 = vmatmul.mubr.bf16.gmra.mxu0 %v370
      %v521 = vpop.f32.mrf.mxu0
      %v522 = vadd.f32 %v220, %v521
      %v523 = vpop.f32.mrf.mxu0
      %v524 = vpop.f32.mrf.mxu0
      %v525 = vadd.f32 %v220, %v524
      %v526 = vpop.f32.mrf.mxu0
      %527 = vmatprep.mubr.bf16.mxu0 0
      %528 = vmatmul.mubr.bf16.gmra.mxu0 %v373
      %v529 = vpop.f32.mrf.mxu0
      %v530 = vadd.f32 %v220, %v529
      %v531 = vpop.f32.mrf.mxu0
      %v532 = vpop.f32.mrf.mxu0
      %v533 = vadd.f32 %v220, %v532
      %v534 = vpop.f32.mrf.mxu0
      %535 = vdwg.mxu0
      %v536 = vmul.f32 %v410, 0.1
      %v537 = vmul.f32 %v413, 0.1
      %v538 = vmul.f32 %v418, 0.1
      %v539 = vmul.f32 %v421, 0.1
      %v540 = vmul.f32 %v426, 0.1
      %v541 = vmul.f32 %v429, 0.1
      %v542 = vmul.f32 %v434, 0.1
      %v543 = vmul.f32 %v437, 0.1
      %v544 = vmul.f32 %v442, 0.1
      %v545 = vmul.f32 %v445, 0.1
      %v546 = vmul.f32 %v450, 0.1
      %v547 = vmul.f32 %v453, 0.1
      %v548 = vmul.f32 %v458, 0.1
      %v549 = vmul.f32 %v461, 0.1
      %v550 = vmul.f32 %v466, 0.1
      %v551 = vmul.f32 %v469, 0.1
      %v552 = vmul.f32 %v474, 0.1
      %v553 = vmul.f32 %v477, 0.1
      %v554 = vmul.f32 %v482, 0.1
      %v555 = vmul.f32 %v485, 0.1
      %v556 = vmul.f32 %v490, 0.1
      %v557 = vmul.f32 %v493, 0.1
      %v558 = vmul.f32 %v498, 0.1
      %v559 = vmul.f32 %v501, 0.1
      %v560 = vmul.f32 %v506, 0.1
      %v561 = vmul.f32 %v509, 0.1
      %v562 = vmul.f32 %v514, 0.1
      %v563 = vmul.f32 %v517, 0.1
      %v564 = vmul.f32 %v522, 0.1
      %v565 = vmul.f32 %v525, 0.1
      %v566 = vmul.f32 %v530, 0.1
      %v567 = vmul.f32 %v533, 0.1
      %v568 = vmax.f32 %v410, %v536
      %v569 = vmax.f32 %v413, %v537
      %v570 = vmax.f32 %v418, %v538
      %v571 = vmax.f32 %v421, %v539
      %v572 = vmax.f32 %v426, %v540
      %v573 = vmax.f32 %v429, %v541
      %v574 = vmax.f32 %v434, %v542
      %v575 = vmax.f32 %v437, %v543
      %v576 = vmax.f32 %v442, %v544
      %v577 = vmax.f32 %v445, %v545
      %v578 = vmax.f32 %v450, %v546
      %v579 = vmax.f32 %v453, %v547
      %v580 = vmax.f32 %v458, %v548
      %v581 = vmax.f32 %v461, %v549
      %v582 = vmax.f32 %v466, %v550
      %v583 = vmax.f32 %v469, %v551
      %v584 = vmax.f32 %v474, %v552
      %v585 = vmax.f32 %v477, %v553
      %v586 = vmax.f32 %v482, %v554
      %v587 = vmax.f32 %v485, %v555
      %v588 = vmax.f32 %v490, %v556
      %v589 = vmax.f32 %v493, %v557
      %v590 = vmax.f32 %v498, %v558
      %v591 = vmax.f32 %v501, %v559
      %v592 = vmax.f32 %v506, %v560
      %v593 = vmax.f32 %v509, %v561
      %v594 = vmax.f32 %v514, %v562
      %v595 = vmax.f32 %v517, %v563
      %v596 = vmax.f32 %v522, %v564
      %v597 = vmax.f32 %v525, %v565
      %v598 = vmax.f32 %v530, %v566
      %v599 = vmax.f32 %v533, %v567
      %v600 = vpack.c.bf16 %v569, %v568
      %v601 = vpack.c.bf16 %v571, %v570
      %v602 = vpack.c.bf16 %v573, %v572
      %v603 = vpack.c.bf16 %v575, %v574
      %v604 = vpack.c.bf16 %v577, %v576
      %v605 = vpack.c.bf16 %v579, %v578
      %v606 = vpack.c.bf16 %v581, %v580
      %v607 = vpack.c.bf16 %v583, %v582
      %v608 = vpack.c.bf16 %v585, %v584
      %v609 = vpack.c.bf16 %v587, %v586
      %v610 = vpack.c.bf16 %v589, %v588
      %v611 = vpack.c.bf16 %v591, %v590
      %v612 = vpack.c.bf16 %v593, %v592
      %v613 = vpack.c.bf16 %v595, %v594
      %v614 = vpack.c.bf16 %v597, %v596
      %v615 = vpack.c.bf16 %v599, %v598
      %v632 = vunpack.c.l.b16 %v600
      %v633 = vunpack.c.h.b16 %v600
      %v634 = vunpack.c.l.b16 %v601
      %v635 = vunpack.c.h.b16 %v601
      %v636 = vunpack.c.l.b16 %v602
      %v637 = vunpack.c.h.b16 %v602
      %v638 = vunpack.c.l.b16 %v603
      %v639 = vunpack.c.h.b16 %v603
      %v640 = vunpack.c.l.b16 %v604
      %v641 = vunpack.c.h.b16 %v604
      %v642 = vunpack.c.l.b16 %v605
      %v643 = vunpack.c.h.b16 %v605
      %v644 = vunpack.c.l.b16 %v606
      %v645 = vunpack.c.h.b16 %v606
      %v646 = vunpack.c.l.b16 %v607
      %v647 = vunpack.c.h.b16 %v607
      %v648 = vunpack.c.l.b16 %v608
      %v649 = vunpack.c.h.b16 %v608
      %v650 = vunpack.c.l.b16 %v609
      %v651 = vunpack.c.h.b16 %v609
      %v652 = vunpack.c.l.b16 %v610
      %v653 = vunpack.c.h.b16 %v610
      %v654 = vunpack.c.l.b16 %v611
      %v655 = vunpack.c.h.b16 %v611
      %v656 = vunpack.c.l.b16 %v612
      %v657 = vunpack.c.h.b16 %v612
      %v658 = vunpack.c.l.b16 %v613
      %v659 = vunpack.c.h.b16 %v613
      %v660 = vunpack.c.l.b16 %v614
      %v661 = vunpack.c.h.b16 %v614
      %v662 = vunpack.c.l.b16 %v615
      %v663 = vunpack.c.h.b16 %v615
      %v664 = vpack.c.b16 %v632, %v632
      %v665 = vpack.c.b16 %v633, %v633
      %v666 = vpack.c.b16 %v634, %v634
      %v667 = vpack.c.b16 %v635, %v635
      %v668 = vpack.c.b16 %v636, %v636
      %v669 = vpack.c.b16 %v637, %v637
      %v670 = vpack.c.b16 %v638, %v638
      %v671 = vpack.c.b16 %v639, %v639
      %v672 = vpack.c.b16 %v640, %v640
      %v673 = vpack.c.b16 %v641, %v641
      %v674 = vpack.c.b16 %v642, %v642
      %v675 = vpack.c.b16 %v643, %v643
      %v676 = vpack.c.b16 %v644, %v644
      %v677 = vpack.c.b16 %v645, %v645
      %v678 = vpack.c.b16 %v646, %v646
      %v679 = vpack.c.b16 %v647, %v647
      %v680 = vpack.c.b16 %v648, %v648
      %v681 = vpack.c.b16 %v649, %v649
      %v682 = vpack.c.b16 %v650, %v650
      %v683 = vpack.c.b16 %v651, %v651
      %v684 = vpack.c.b16 %v652, %v652
      %v685 = vpack.c.b16 %v653, %v653
      %v686 = vpack.c.b16 %v654, %v654
      %v687 = vpack.c.b16 %v655, %v655
      %v688 = vpack.c.b16 %v656, %v656
      %v689 = vpack.c.b16 %v657, %v657
      %v690 = vpack.c.b16 %v658, %v658
      %v691 = vpack.c.b16 %v659, %v659
      %v692 = vpack.c.b16 %v660, %v660
      %v693 = vpack.c.b16 %v661, %v661
      %v694 = vpack.c.b16 %v662, %v662
      %v695 = vpack.c.b16 %v663, %v663
      %vm728 = vcmask 60416
      %729 = vst.msk [vmem:[%s172] sm:$0xf] %vm728, %v664
      %730 = vst.msk [vmem:[%s172 + $0x4] sm:$0xf] %vm728, %v665
      %731 = vst.msk [vmem:[%s172 + $0x8] sm:$0xf] %vm728, %v666
      %732 = vst.msk [vmem:[%s172 + $0xc] sm:$0xf] %vm728, %v667
      %733 = vst.msk [vmem:[%s172 + $0x10] sm:$0xf] %vm728, %v668
      %734 = vst.msk [vmem:[%s172 + $0x14] sm:$0xf] %vm728, %v669
      %735 = vst.msk [vmem:[%s172 + $0x18] sm:$0xf] %vm728, %v670
      %736 = vst.msk [vmem:[%s172 + $0x1c] sm:$0xf] %vm728, %v671
      %737 = vst.msk [vmem:[%s172 + $0x20] sm:$0xf] %vm728, %v672
      %738 = vst.msk [vmem:[%s172 + $0x24] sm:$0xf] %vm728, %v673
      %739 = vst.msk [vmem:[%s172 + $0x28] sm:$0xf] %vm728, %v674
      %740 = vst.msk [vmem:[%s172 + $0x2c] sm:$0xf] %vm728, %v675
      %741 = vst.msk [vmem:[%s172 + $0x30] sm:$0xf] %vm728, %v676
      %742 = vst.msk [vmem:[%s172 + $0x34] sm:$0xf] %vm728, %v677
      %743 = vst.msk [vmem:[%s172 + $0x38] sm:$0xf] %vm728, %v678
      %744 = vst.msk [vmem:[%s172 + $0x3c] sm:$0xf] %vm728, %v679
      %745 = vst.msk [vmem:[%s172 + $0x40] sm:$0xf] %vm728, %v680
      %746 = vst.msk [vmem:[%s172 + $0x44] sm:$0xf] %vm728, %v681
      %747 = vst.msk [vmem:[%s172 + $0x48] sm:$0xf] %vm728, %v682
      %748 = vst.msk [vmem:[%s172 + $0x4c] sm:$0xf] %vm728, %v683
      %749 = vst.msk [vmem:[%s172 + $0x50] sm:$0xf] %vm728, %v684
      %750 = vst.msk [vmem:[%s172 + $0x54] sm:$0xf] %vm728, %v685
      %751 = vst.msk [vmem:[%s172 + $0x58] sm:$0xf] %vm728, %v686
      %752 = vst.msk [vmem:[%s172 + $0x5c] sm:$0xf] %vm728, %v687
      %753 = vst.msk [vmem:[%s172 + $0x60] sm:$0xf] %vm728, %v688
      %754 = vst.msk [vmem:[%s172 + $0x64] sm:$0xf] %vm728, %v689
      %755 = vst.msk [vmem:[%s172 + $0x68] sm:$0xf] %vm728, %v690
      %756 = vst.msk [vmem:[%s172 + $0x6c] sm:$0xf] %vm728, %v691
      %757 = vst.msk [vmem:[%s172 + $0x70] sm:$0xf] %vm728, %v692
      %758 = vst.msk [vmem:[%s172 + $0x74] sm:$0xf] %vm728, %v693
      %759 = vst.msk [vmem:[%s172 + $0x78] sm:$0xf] %vm728, %v694
      %760 = vst.msk [vmem:[%s172 + $0x7c] sm:$0xf] %vm728, %v695
      %s761 = smul.u32 32, %s14
      %p762 = scmp.lt.s32.totalorder %s761, 63
      %s763 = scalar_select %p762, %s761, 63
      %s764 = smul.addr %s763, 4
      %s765 = scalar_lea.vmem %s3, %s764
      // Predicated region
      $region33: #{darknet_cbr.1} parent=31 // pred_check
        %p766 = pneg %p100
      $region34: #{darknet_cbr.1} parent=31 // pred_check_branch
        %768 = sbr.rel (%p766) target = $region36
      $region35: #{darknet_cbr.1} parent=31 // pred_region
        %s769 = smul.u32 32, %s14
      $region36: #{darknet_cbr.1} parent=31 // pred_fallthru
        _
    $region32: #{darknet_cbr.1} parent=5 // pred_fallthru
      _
    %p770 = scmp.le.s32.totalorder 2, %s9
    // Predicated region
    $region37: #{darknet_cbr.1} parent=5 // pred_check
      %p771 = pneg %p770
    $region38: #{darknet_cbr.1} parent=5 // pred_check_branch
      %773 = sbr.rel (%p771) target = $region40
    $region39: #{darknet_cbr.1} parent=5 // pred_region
      %s774 = ssub.s32 %s9, 2
      // Predicated region
      $region41: #{darknet_cbr.1} parent=39 // pred_check
        %p775 = pneg %p106
      $region42: #{darknet_cbr.1} parent=39 // pred_check_branch
        %777 = sbr.rel (%p775) target = $region44
      $region43: #{darknet_cbr.1} parent=39 // pred_region
        %s778 = smul.u32 32, %s15
        %p779 = scmp.lt.s32.totalorder %s778, 63
        %s780 = scalar_select %p779, %s778, 63
        %s781 = smul.addr %s780, 4
        %s782 = scalar_lea.vmem %s3, %s781
      $region44: #{darknet_cbr.1} parent=39 // pred_fallthru
        _
    $region40: #{darknet_cbr.1} parent=5 // pred_fallthru
      _
  $region6: #{darknet_cbr.1} parent=0 // loop_footer
    %s13 = sadd.s32 1, %s9
  $region7: #{darknet_cbr.1} parent=0 // loop_footer_branch
    %8 = sbr.rel target = $region3
  $region8: #{darknet_cbr.1} parent=0 // loop_exit
    _

</llo_original>
